<compile_context>
chip_gen: v5e
topology: v5e:2x2
jax: 0.10.0
libtpu: 0.0.40
codegen_flags: <defaults>
</compile_context>

<pallas_src>
import jax
import jax.numpy as jnp
from jax import lax
from jax.experimental import pallas as pl
from jax.experimental.pallas import tpu as pltpu


def iprformer_kernel(x_ref, wc_ref, bc_ref, out_ref):
    """x_ref : (tile_b, max_iprs) int32 indices (VMEM block for this batch tile).
    wc_ref : (ni_pad, cpad) fused weight, grid-invariant resident VMEM block.
    bc_ref : (1, cpad) f32 fused bias, grid-invariant.
    out_ref: (tile_b, cpad) f32 output block for this grid step.
    """
    tile_b, max_iprs = x_ref.shape
    ni_pad = wc_ref.shape[0]

    idx = x_ref[...]                                            # (tile_b, M) int32
    iota = lax.broadcasted_iota(jnp.int32, (tile_b, ni_pad), 1)

    # Multi-hot via compare+max: padding index (== num_interpros) either falls
    # outside [0, ni_pad) or hits an appended zero row; duplicates collapse.
    mh = jnp.zeros((tile_b, ni_pad), dtype=jnp.float32)
    for k in range(max_iprs):                                   # static, unrolled
        mh = jnp.maximum(mh, (iota == idx[:, k:k + 1]).astype(jnp.float32))

    acc = jnp.dot(mh.astype(wc_ref.dtype), wc_ref[...],
                  preferred_element_type=jnp.float32)           # MXU
    out_ref[...] = acc + bc_ref[...]                            # single dense store


def fuse_params(w1, b1, w2, b2, *, weights_dtype=jnp.float32, lane_pad=128):
    """Fold the two bias-Linears into one (done once, outside the hot path).

    w1: (embed_dims, num_interpros)  b1: (embed_dims,)   [PyTorch (out, in)]
    w2: (num_classes, embed_dims)    b2: (num_classes,)
    Returns Wc (ni_pad, cpad) and bc (1, cpad): lane axis zero-padded to a
    multiple of 128 (lane-dense stores), sublane axis to a multiple of 8.
    Extra rows/cols are zero, so they never change the result.
    """
    num_classes = w2.shape[0]
    num_interpros = w1.shape[1]
    wc = lax.dot_general(w1, w2, (((0,), (1,)), ((), ())),
                         preferred_element_type=jnp.float32)        # (NI, C)
    bc = lax.dot_general(b1, w2, (((0,), (1,)), ((), ())),
                         preferred_element_type=jnp.float32) + b2   # (C,)
    cpad = max(lane_pad, pl.cdiv(num_classes, lane_pad) * lane_pad)
    ni_pad = pl.cdiv(num_interpros, 8) * 8
    wc = jnp.pad(wc, ((0, ni_pad - num_interpros), (0, cpad - num_classes)))
    bc = jnp.pad(bc, (0, cpad - num_classes)).reshape(1, cpad)
    return wc.astype(weights_dtype), bc.astype(jnp.float32)


def iprformer_forward(x, wc, bc, num_classes, *, tile_b=128):
    """x: (B, max_iprs) int32 indices in [0, num_interpros] (num_interpros == pad).
    wc/bc: fused params from fuse_params().  Returns (B, num_classes) float32."""
    batch, max_iprs = x.shape
    ni_pad, cpad = wc.shape

    # Keep at least 2 grid programs when the batch allows (v7x has 2 TCs);
    # otherwise use the largest multiple-of-8 tile that covers the batch.
    if tile_b * 2 > batch:
        tile_b = max(8, pl.cdiv(pl.cdiv(batch, 2), 8) * 8)

    b_pad = pl.cdiv(batch, tile_b) * tile_b
    if b_pad != batch:
        # Extra rows get the padding index -> they contribute only bc (sliced off).
        x = jnp.pad(x, ((0, b_pad - batch), (0, 0)), constant_values=ni_pad)
    x = x.astype(jnp.int32)

    # Scoped-VMEM budget: double-buffered blocks + headroom for the multi-hot.
    vmem_limit = int(min(
        2 * (wc.size * wc.dtype.itemsize + bc.size * bc.dtype.itemsize
             + tile_b * max_iprs * 4 + tile_b * cpad * 4) + (8 << 20),
        64 << 20))

    out = pl.pallas_call(
        iprformer_kernel,
        out_shape=jax.ShapeDtypeStruct((b_pad, cpad), jnp.float32),
        grid_spec=pltpu.PrefetchScalarGridSpec(
            num_scalar_prefetch=0,
            grid=(b_pad // tile_b,),
            in_specs=[
                pl.BlockSpec((tile_b, max_iprs), lambda i: (i, 0)),  # x: per-step tile
                pl.BlockSpec((ni_pad, cpad), lambda i: (0, 0)),      # Wc: resident
                pl.BlockSpec((1, cpad), lambda i: (0, 0)),           # bc: resident
            ],
            out_specs=pl.BlockSpec((tile_b, cpad), lambda i: (i, 0)),
        ),
        compiler_params=pltpu.CompilerParams(
            dimension_semantics=("parallel",),
            vmem_limit_bytes=vmem_limit),
    )(x, wc, bc)
    return out[:batch, :num_classes]


def reference_forward(x, w1, b1, w2, b2, num_interpros):
    """Pure-JAX reference mirroring the PyTorch module exactly."""
    onehot = jax.nn.one_hot(x, num_interpros + 1, dtype=jnp.float32)  # (B, M, NI+1)
    bipr = jnp.max(onehot, axis=1)[:, :-1]                            # (B, NI)
    h = bipr @ w1.T + b1
    return h @ w2.T + b2


if __name__ == "__main__":
    # Small shapes consistent with the module (batch big enough for a 2-program grid).
    batch = 64
    num_interpros = 256
    embed_dims = 32
    num_classes = 16
    max_iprs = 8

    key = jax.random.PRNGKey(0)
    k_x, k_w1, k_b1, k_w2, k_b2 = jax.random.split(key, 5)

    # Interpro indices; value == num_interpros acts as padding (dropped column).
    x = jax.random.randint(k_x, (batch, max_iprs), 0, num_interpros + 1,
                           dtype=jnp.int32)
    # Force a duplicate index and a padding index so both semantics are tested.
    x = x.at[0, 1].set(x[0, 0])
    x = x.at[1, 3].set(num_interpros)

    # Deterministic parameter init (PyTorch nn.Linear layout: (out, in)).
    w1 = jax.random.uniform(k_w1, (embed_dims, num_interpros), jnp.float32,
                            -0.05, 0.05)
    b1 = jax.random.uniform(k_b1, (embed_dims,), jnp.float32, -0.05, 0.05)
    w2 = jax.random.uniform(k_w2, (num_classes, embed_dims), jnp.float32,
                            -0.1, 0.1)
    b2 = jax.random.uniform(k_b2, (num_classes,), jnp.float32, -0.1, 0.1)

    # One-time parameter fusion (outside the per-call hot path).
    wc, bc = fuse_params(w1, b1, w2, b2)

    out = iprformer_forward(x, wc, bc, num_classes)
    out = jax.block_until_ready(out)

    ref = reference_forward(x, w1, b1, w2, b2, num_interpros)
    assert out.shape == (batch, num_classes)
    assert jnp.allclose(out, ref, atol=1e-4, rtol=1e-4), \
        float(jnp.max(jnp.abs(out - ref)))

    print("KERNEL_OK")
</pallas_src>

<mosaic_0001>
module attributes {stable_mosaic.version = 11 : i64} {
  func.func @iprformer_kernel(%arg0: i32, %arg1: memref<32x8xi32, #tpu.memory_space<vmem>>, %arg2: memref<256x128xf32, #tpu.memory_space<vmem>>, %arg3: memref<1x128xf32, #tpu.memory_space<vmem>>, %arg4: memref<32x128xf32, #tpu.memory_space<vmem>>) attributes {dimension_semantics = [#tpu.dimension_semantics<parallel>], iteration_bounds = array<i64: 2>, scalar_prefetch = 0 : i64, scratch_operands = 0 : i64, tpu.core_type = #tpu.core_type<tc>, window_params = [{transform_indices = @transform_0, window_bounds = array<i64: 32, 8>}, {pipeline_mode = #tpu.pipeline_mode<synchronous>, transform_indices = @transform_1, window_bounds = array<i64: 256, 128>}, {pipeline_mode = #tpu.pipeline_mode<synchronous>, transform_indices = @transform_2, window_bounds = array<i64: 1, 128>}, {transform_indices = @transform_3, window_bounds = array<i64: 32, 128>}]} {
    %c0 = arith.constant 0 : index
    %c0_0 = arith.constant 0 : index
    %0 = vector.load %arg1[%c0, %c0_0] : memref<32x8xi32, #tpu.memory_space<vmem>>, vector<32x8xi32>
    %1 = tpu.iota {dimensions = array<i32: 1>} : vector<32x256xi32>
    %cst = arith.constant 0.000000e+00 : f32
    %2 = vector.broadcast %cst : f32 to vector<32x256xf32>
    %3 = vector.extract_strided_slice %0 {offsets = [0, 0], sizes = [32, 1], strides = [1, 1]} : vector<32x8xi32> to vector<32x1xi32>
    %4 = vector.broadcast %3 : vector<32x1xi32> to vector<32x256xi32>
    %5 = arith.cmpi eq, %1, %4 : vector<32x256xi32>
    %6 = arith.extui %5 : vector<32x256xi1> to vector<32x256xi32>
    %7 = arith.sitofp %6 : vector<32x256xi32> to vector<32x256xf32>
    %8 = arith.maximumf %2, %7 : vector<32x256xf32>
    %9 = vector.extract_strided_slice %0 {offsets = [0, 1], sizes = [32, 1], strides = [1, 1]} : vector<32x8xi32> to vector<32x1xi32>
    %10 = vector.broadcast %9 : vector<32x1xi32> to vector<32x256xi32>
    %11 = arith.cmpi eq, %1, %10 : vector<32x256xi32>
    %12 = arith.extui %11 : vector<32x256xi1> to vector<32x256xi32>
    %13 = arith.sitofp %12 : vector<32x256xi32> to vector<32x256xf32>
    %14 = arith.maximumf %8, %13 : vector<32x256xf32>
    %15 = vector.extract_strided_slice %0 {offsets = [0, 2], sizes = [32, 1], strides = [1, 1]} : vector<32x8xi32> to vector<32x1xi32>
    %16 = vector.broadcast %15 : vector<32x1xi32> to vector<32x256xi32>
    %17 = arith.cmpi eq, %1, %16 : vector<32x256xi32>
    %18 = arith.extui %17 : vector<32x256xi1> to vector<32x256xi32>
    %19 = arith.sitofp %18 : vector<32x256xi32> to vector<32x256xf32>
    %20 = arith.maximumf %14, %19 : vector<32x256xf32>
    %21 = vector.extract_strided_slice %0 {offsets = [0, 3], sizes = [32, 1], strides = [1, 1]} : vector<32x8xi32> to vector<32x1xi32>
    %22 = vector.broadcast %21 : vector<32x1xi32> to vector<32x256xi32>
    %23 = arith.cmpi eq, %1, %22 : vector<32x256xi32>
    %24 = arith.extui %23 : vector<32x256xi1> to vector<32x256xi32>
    %25 = arith.sitofp %24 : vector<32x256xi32> to vector<32x256xf32>
    %26 = arith.maximumf %20, %25 : vector<32x256xf32>
    %27 = vector.extract_strided_slice %0 {offsets = [0, 4], sizes = [32, 1], strides = [1, 1]} : vector<32x8xi32> to vector<32x1xi32>
    %28 = vector.broadcast %27 : vector<32x1xi32> to vector<32x256xi32>
    %29 = arith.cmpi eq, %1, %28 : vector<32x256xi32>
    %30 = arith.extui %29 : vector<32x256xi1> to vector<32x256xi32>
    %31 = arith.sitofp %30 : vector<32x256xi32> to vector<32x256xf32>
    %32 = arith.maximumf %26, %31 : vector<32x256xf32>
    %33 = vector.extract_strided_slice %0 {offsets = [0, 5], sizes = [32, 1], strides = [1, 1]} : vector<32x8xi32> to vector<32x1xi32>
    %34 = vector.broadcast %33 : vector<32x1xi32> to vector<32x256xi32>
    %35 = arith.cmpi eq, %1, %34 : vector<32x256xi32>
    %36 = arith.extui %35 : vector<32x256xi1> to vector<32x256xi32>
    %37 = arith.sitofp %36 : vector<32x256xi32> to vector<32x256xf32>
    %38 = arith.maximumf %32, %37 : vector<32x256xf32>
    %39 = vector.extract_strided_slice %0 {offsets = [0, 6], sizes = [32, 1], strides = [1, 1]} : vector<32x8xi32> to vector<32x1xi32>
    %40 = vector.broadcast %39 : vector<32x1xi32> to vector<32x256xi32>
    %41 = arith.cmpi eq, %1, %40 : vector<32x256xi32>
    %42 = arith.extui %41 : vector<32x256xi1> to vector<32x256xi32>
    %43 = arith.sitofp %42 : vector<32x256xi32> to vector<32x256xf32>
    %44 = arith.maximumf %38, %43 : vector<32x256xf32>
    %45 = vector.extract_strided_slice %0 {offsets = [0, 7], sizes = [32, 1], strides = [1, 1]} : vector<32x8xi32> to vector<32x1xi32>
    %46 = vector.broadcast %45 : vector<32x1xi32> to vector<32x256xi32>
    %47 = arith.cmpi eq, %1, %46 : vector<32x256xi32>
    %48 = arith.extui %47 : vector<32x256xi1> to vector<32x256xi32>
    %49 = arith.sitofp %48 : vector<32x256xi32> to vector<32x256xf32>
    %50 = arith.maximumf %44, %49 : vector<32x256xf32>
    %c0_1 = arith.constant 0 : index
    %c0_2 = arith.constant 0 : index
    %51 = vector.load %arg2[%c0_1, %c0_2] : memref<256x128xf32, #tpu.memory_space<vmem>>, vector<256x128xf32>
    %cst_3 = arith.constant dense<0.000000e+00> : vector<32x128xf32>
    %52 = tpu.matmul %50, %51, %cst_3 {dimension_numbers = #tpu.dot_dimension_numbers<[1], [0], [0], [1], [0, 0, 1, 1], [], []>} : vector<32x256xf32>, vector<256x128xf32>, vector<32x128xf32> -> vector<32x128xf32>
    %c0_4 = arith.constant 0 : index
    %c0_5 = arith.constant 0 : index
    %53 = vector.load %arg3[%c0_4, %c0_5] : memref<1x128xf32, #tpu.memory_space<vmem>>, vector<1x128xf32>
    %54 = vector.broadcast %53 : vector<1x128xf32> to vector<32x128xf32>
    %55 = arith.addf %52, %54 : vector<32x128xf32>
    %c0_6 = arith.constant 0 : index
    %c0_7 = arith.constant 0 : index
    %56 = vector.load %arg4[%c0_6, %c0_7] : memref<32x128xf32, #tpu.memory_space<vmem>>, vector<32x128xf32>
    tpu.vector_store %arg4[%c0_6, %c0_7], %55 {strides = array<i32>} : memref<32x128xf32, #tpu.memory_space<vmem>>, vector<32x128xf32>,
    return
  }
  func.func @transform_0(%arg0: i32) -> (i32, i32) {
    %c0_i32 = arith.constant 0 : i32
    %c0_i32_0 = arith.constant 0 : i32
    return %arg0, %c0_i32 : i32, i32
  }
  func.func @transform_1(%arg0: i32) -> (i32, i32) {
    %c0_i32 = arith.constant 0 : i32
    %c0_i32_0 = arith.constant 0 : i32
    %c0_i32_1 = arith.constant 0 : i32
    return %c0_i32, %c0_i32_0 : i32, i32
  }
  func.func @transform_2(%arg0: i32) -> (i32, i32) {
    %c0_i32 = arith.constant 0 : i32
    %c0_i32_0 = arith.constant 0 : i32
    %c0_i32_1 = arith.constant 0 : i32
    return %c0_i32, %c0_i32_0 : i32, i32
  }
  func.func @transform_3(%arg0: i32) -> (i32, i32) {
    %c0_i32 = arith.constant 0 : i32
    %c0_i32_0 = arith.constant 0 : i32
    return %arg0, %c0_i32 : i32, i32
  }
}

</mosaic_0001>

<llo_original>
// kernel: tpu_custom_call.1
$region0: #{tpu_custom_call.1}
  #allocation0 [shape = 'u32[]', space=smem, size = 0x4, offset = 0x4, fixed_abs, tag = 'smem constant byte address 0x4 - core index']
  #allocation1 [shape = 'u32[72,128]{1,0:T(1,128)}', space=vmem, size = 0x9000, scoped, tag = 'internal scratch']
  %s0 = inlined_call_operand.vmem [shape: s32[64,8], index: 0, kind: input, shape index: {}]
  %s1 = inlined_call_operand.hbm [shape: f32[256,128], index: 1, kind: input, shape index: {}]
  %s2 = inlined_call_operand.vmem [shape: f32[1,128], index: 2, kind: input, shape index: {}]
  %s3 = inlined_call_operand.hbm [shape: f32[64,128], index: 3, kind: output, shape index: {}]
  %s4 = sld [smem:[#allocation0]]
  $region49: #{tpu_custom_call.1} parent=0
    _
  %s6 = ssub.s32 1, %s4
  %s7 = scalar_select 0, %s6, %s4
  $region1: #{tpu_custom_call.1} parent=0
    #allocation2 [shape = 'u8[131072]{0}', space=vmem, size = 0x20000, scoped, tag = 'input window, operand 1, single buffered']
    #allocation3 [shape = 's32[2]{0}', space=sflag, size = 0x8, scoped, tag = 'scoped memory for tpu_custom_call.1']
    #allocation4 [shape = 's32[2]{0}', space=sflag, size = 0x8, scoped, tag = 'scoped memory for tpu_custom_call.1']
    #allocation5 [shape = 'u8[32768]{0}', space=vmem, size = 0x8000, scoped, tag = 'output window, operand 0']
    %8 = vsyncpa [#allocation3], 0
    %9 = vsyncpa [#allocation4], 0
    %s10 = scalar_lea.sflag [#allocation4], 1
    %11 = vsyncpa %s10, 0
    loop: start=0, step=1, limit=4
    $region2: #{tpu_custom_call.1} parent=1 // loop_pre_header
      _
    $region3: #{tpu_custom_call.1} parent=1 // loop_header
      %s13 = sphi 0, %s17
      %p14 = scmp.ge.s32.totalorder %s13, 4
      %s23 = sphi 0, %s25
      %s26 = sphi 0, %s23
      %s27 = sphi 0, %s26
      %s43 = sphi 0, %s27
      %s47 = sphi 0, %s47
      %s49 = sphi 0, %s47
      %s50 = sphi 0, %s49
      %s64 = sphi 0, %s50
      %s68 = sphi 0, %s68
      %s70 = sphi 0, %s68
      %s71 = sphi 0, %s70
      %s85 = sphi 0, %s71
      %s91 = sphi 0, %s93
      %s94 = sphi 0, %s91
      %s95 = sphi 0, %s94
      %s111 = sphi 0, %s95
    $region4: #{tpu_custom_call.1} parent=1 // loop_header_branch
      %16 = sbr.rel (%p14) target = $region8
    $region5: #{tpu_custom_call.1} parent=1 // loop_body
      %s18 = ssub.s32 %s13, 1
      %s19 = ssub.s32 %s13, 2
      %s20 = sadd.s32 %s13, 1
      %s21 = ssub.s32 %s13, %s20
      %p22 = scmp.eq.s32.totalorder %s21, 0
      %s24 = sadd.s32 %s23, 1
      %s25 = scalar_select %p22, %s23, %s24
      %p28 = pneg %p22
      %p29 = scmp.eq.s32.totalorder %s13, 1
      %p30 = por %p28, %p29
      %p31 = scmp.ne.s32.totalorder %s23, %s26
      %p32 = scmp.eq.s32.totalorder %s13, 0
      %p33 = por %p31, %p32
      %p34 = scmp.ne.s32.totalorder %s23, %s26
      %p35 = scmp.eq.s32.totalorder %s18, 1
      %p36 = por %p34, %p35
      %p37 = scmp.ne.s32.totalorder %s26, %s27
      %p38 = scmp.eq.s32.totalorder %s18, 0
      %p39 = por %p37, %p38
      %p40 = scmp.ne.s32.totalorder %s26, %s27
      %p41 = scmp.eq.s32.totalorder %s19, 1
      %p42 = por %p40, %p41
      %p44 = scmp.ne.s32.totalorder %s27, %s43
      %p45 = scmp.eq.s32.totalorder %s19, 0
      %p46 = por %p44, %p45
      %s48 = sadd.s32 %s47, 1
      %p51 = scmp.eq.s32.totalorder %s13, 1
      %p52 = scmp.ne.s32.totalorder %s47, %s49
      %p53 = scmp.eq.s32.totalorder %s13, 0
      %p54 = por %p52, %p53
      %p55 = scmp.ne.s32.totalorder %s47, %s49
      %p56 = scmp.eq.s32.totalorder %s18, 1
      %p57 = por %p55, %p56
      %p58 = scmp.ne.s32.totalorder %s49, %s50
      %p59 = scmp.eq.s32.totalorder %s18, 0
      %p60 = por %p58, %p59
      %p61 = scmp.ne.s32.totalorder %s49, %s50
      %p62 = scmp.eq.s32.totalorder %s19, 1
      %p63 = por %p61, %p62
      %p65 = scmp.ne.s32.totalorder %s50, %s64
      %p66 = scmp.eq.s32.totalorder %s19, 0
      %p67 = por %p65, %p66
      %s69 = sadd.s32 %s68, 1
      %p72 = scmp.eq.s32.totalorder %s13, 1
      %p73 = scmp.ne.s32.totalorder %s68, %s70
      %p74 = scmp.eq.s32.totalorder %s13, 0
      %p75 = por %p73, %p74
      %p76 = scmp.ne.s32.totalorder %s68, %s70
      %p77 = scmp.eq.s32.totalorder %s18, 1
      %p78 = por %p76, %p77
      %p79 = scmp.ne.s32.totalorder %s70, %s71
      %p80 = scmp.eq.s32.totalorder %s18, 0
      %p81 = por %p79, %p80
      %p82 = scmp.ne.s32.totalorder %s70, %s71
      %p83 = scmp.eq.s32.totalorder %s19, 1
      %p84 = por %p82, %p83
      %p86 = scmp.ne.s32.totalorder %s71, %s85
      %p87 = scmp.eq.s32.totalorder %s19, 0
      %p88 = por %p86, %p87
      %s89 = ssub.s32 %s13, %s20
      %p90 = scmp.eq.s32.totalorder %s89, 0
      %s92 = sadd.s32 %s91, 1
      %s93 = scalar_select %p90, %s91, %s92
      %p96 = pneg %p90
      %p97 = scmp.eq.s32.totalorder %s13, 1
      %p98 = por %p96, %p97
      %p99 = scmp.ne.s32.totalorder %s91, %s94
      %p100 = scmp.eq.s32.totalorder %s13, 0
      %p101 = por %p99, %p100
      %p102 = scmp.ne.s32.totalorder %s91, %s94
      %p103 = scmp.eq.s32.totalorder %s18, 1
      %p104 = por %p102, %p103
      %p105 = scmp.ne.s32.totalorder %s94, %s95
      %p106 = scmp.eq.s32.totalorder %s18, 0
      %p107 = por %p105, %p106
      %p108 = scmp.ne.s32.totalorder %s94, %s95
      %p109 = scmp.eq.s32.totalorder %s19, 1
      %p110 = por %p108, %p109
      %p112 = scmp.ne.s32.totalorder %s95, %s111
      %p113 = scmp.eq.s32.totalorder %s19, 0
      %p114 = por %p112, %p113
      %p115 = scmp.le.s32.totalorder 1, %s13
      %p116 = scmp.lt.s32.totalorder %s13, 3
      %p117 = pnand %p115, %p116
      %p118 = pneg %p117
      // Predicated region
      $region9: #{tpu_custom_call.1} parent=5 // pred_check
        _
      $region10: #{tpu_custom_call.1} parent=5 // pred_check_branch
        %120 = sbr.rel (%p117) target = $region12
      $region11: #{tpu_custom_call.1} parent=5 // pred_region
        %s121 = ssub.s32 %s13, 1
        // Predicated region
        $region13: #{tpu_custom_call.1} parent=11 // pred_check
          %p122 = pneg %p60
        $region14: #{tpu_custom_call.1} parent=11 // pred_check_branch
          %124 = sbr.rel (%p122) target = $region16
        $region15: #{tpu_custom_call.1} parent=11 // pred_region
          %126 = vsyncadd [#allocation3], 0
          %s127 = sshll.u32 %s1, 4
          %s128 = int_to_ptr.hbm [resolvable:$true] %s127
          %s129 = sshll.u32 [#allocation2], 4
          %s130 = int_to_ptr.vmem [resolvable:$true] %s129
          %135 = dma.hbm_to_vmem [thread:$0]  %s128, 4096, %s130, [#allocation3], 128, 128, 8
        $region16: #{tpu_custom_call.1} parent=11 // pred_fallthru
          _
        // Predicated region
        $region17: #{tpu_custom_call.1} parent=11 // pred_check
          %p136 = pneg %p81
        $region18: #{tpu_custom_call.1} parent=11 // pred_check_branch
          %138 = sbr.rel (%p136) target = $region20
        $region19: #{tpu_custom_call.1} parent=11 // pred_region
          _
        $region20: #{tpu_custom_call.1} parent=11 // pred_fallthru
          _
      $region12: #{tpu_custom_call.1} parent=5 // pred_fallthru
        _
      %p139 = scmp.lt.s32.totalorder %s13, 2
      // Predicated region
      $region21: #{tpu_custom_call.1} parent=5 // pred_check
        %p140 = pneg %p139
      $region22: #{tpu_custom_call.1} parent=5 // pred_check_branch
        %142 = sbr.rel (%p140) target = $region24
      $region23: #{tpu_custom_call.1} parent=5 // pred_region
        // Predicated region
        $region25: #{tpu_custom_call.1} parent=23 // pred_check
          %p143 = pneg %p33
        $region26: #{tpu_custom_call.1} parent=23 // pred_check_branch
          %145 = sbr.rel (%p143) target = $region28
        $region27: #{tpu_custom_call.1} parent=23 // pred_region
          %s146 = smul.u32 4, %s13
          %p147 = scmp.lt.s32.totalorder %s146, 7
          %s148 = scalar_select %p147, %s146, 7
          %s149 = smul.addr %s148, 8
          %s150 = scalar_lea.vmem %s0, %s149
          %s151 = smul.u32 4, %s13
        $region28: #{tpu_custom_call.1} parent=23 // pred_fallthru
          _
      $region24: #{tpu_custom_call.1} parent=5 // pred_fallthru
        _
      %p152 = scmp.le.s32.totalorder 1, %s13
      %p153 = scmp.lt.s32.totalorder %s13, 3
      %p154 = pnand %p152, %p153
      %p155 = pneg %p154
      // Predicated region
      $region29: #{tpu_custom_call.1} parent=5 // pred_check
        _
      $region30: #{tpu_custom_call.1} parent=5 // pred_check_branch
        %157 = sbr.rel (%p154) target = $region32
      $region31: #{tpu_custom_call.1} parent=5 // pred_region
        %s158 = ssub.s32 %s13, 1
        // Predicated region
        $region33: #{tpu_custom_call.1} parent=31 // pred_check
          %p159 = pneg %p60
        $region34: #{tpu_custom_call.1} parent=31 // pred_check_branch
          %161 = sbr.rel (%p159) target = $region36
        $region35: #{tpu_custom_call.1} parent=31 // pred_region
          %163 = dma.done [#allocation3], 4096
        $region36: #{tpu_custom_call.1} parent=31 // pred_fallthru
          _
        %s164 = smul.u32 4, %s18
        %p165 = scmp.lt.s32.totalorder %s164, 7
        %s166 = scalar_select %p165, %s164, 7
        %s167 = smul.addr %s166, 8
        %s168 = scalar_lea.vmem %s0, %s167
        %p169 = pneg %p39
        %p170 = pneg %p36
        %p171 = pneg %p60
        %p172 = pneg %p57
        %p173 = pneg %p81
        %p174 = pneg %p78
        %p175 = pneg %p107
        %p176 = pneg %p104
        %s177 = sand.u32 %s94, 1
        %s178 = scalar_lea.sflag [#allocation4], %s177
        %s179 = sand.u32 %s94, 1
        %s180 = smul.addr %s179, 32
        %s181 = scalar_lea.vmem [#allocation5], %s180
        %s182 = smul.u32 4, %s18
        %p183 = scmp.lt.s32.totalorder %s182, 7
        %s184 = scalar_select %p183, %s182, 7
        %s185 = smul.addr %s184, 8
        %s186 = scalar_lea.vmem %s0, %s185
        %s187 = smul.u32 4, %s18
        %s188 = smul.u32 4, %s18
        %v189 = vld [vmem:[%s186] sm:$0xff]
        %v190 = vld [vmem:[%s186 + $0x8] sm:$0xff]
        %v191 = vld [vmem:[%s186 + $0x10] sm:$0xff]
        %v192 = vld [vmem:[%s186 + $0x18] sm:$0xff]
        %v193 = vlaneseq
        %v194 = vand.u32 %v193, 127
        %v195 = vadd.s32 %v194, 128
        %196 = vset.pattern.permute.xlu0 0
        %197 = vperm.xlu0 %196, %v189
        %v198 = vpop.permute.xlu0 %197
        %199 = vset.pattern.permute.xlu0 0
        %200 = vperm.xlu0 %199, %v190
        %v201 = vpop.permute.xlu0 %200
        %202 = vset.pattern.permute.xlu0 0
        %203 = vperm.xlu0 %202, %v191
        %v204 = vpop.permute.xlu0 %203
        %205 = vset.pattern.permute.xlu0 0
        %206 = vperm.xlu0 %205, %v192
        %v207 = vpop.permute.xlu0 %206
        %vm208 = vcmp.eq.s32.totalorder %v194, %v198
        %vm209 = vcmp.eq.s32.totalorder %v195, %v198
        %vm210 = vcmp.eq.s32.totalorder %v194, %v201
        %vm211 = vcmp.eq.s32.totalorder %v195, %v201
        %vm212 = vcmp.eq.s32.totalorder %v194, %v204
        %vm213 = vcmp.eq.s32.totalorder %v195, %v204
        %vm214 = vcmp.eq.s32.totalorder %v194, %v207
        %vm215 = vcmp.eq.s32.totalorder %v195, %v207
        %v216 = vsel %vm208, 1, 0
        %v217 = vsel %vm209, 1, 0
        %v218 = vsel %vm210, 1, 0
        %v219 = vsel %vm211, 1, 0
        %v220 = vsel %vm212, 1, 0
        %v221 = vsel %vm213, 1, 0
        %v222 = vsel %vm214, 1, 0
        %v223 = vsel %vm215, 1, 0
        %v224 = vcvt.s32.f32 %v216
        %v225 = vcvt.s32.f32 %v217
        %v226 = vcvt.s32.f32 %v218
        %v227 = vcvt.s32.f32 %v219
        %v228 = vcvt.s32.f32 %v220
        %v229 = vcvt.s32.f32 %v221
        %v230 = vcvt.s32.f32 %v222
        %v231 = vcvt.s32.f32 %v223
        %v232 = vmax.f32 %v224, 0.0
        %v233 = vmax.f32 %v225, 0.0
        %v234 = vmax.f32 %v226, 0.0
        %v235 = vmax.f32 %v227, 0.0
        %v236 = vmax.f32 %v228, 0.0
        %v237 = vmax.f32 %v229, 0.0
        %v238 = vmax.f32 %v230, 0.0
        %v239 = vmax.f32 %v231, 0.0
        %240 = vset.pattern.permute.xlu0 1
        %241 = vperm.xlu0 %240, %v189
        %v242 = vpop.permute.xlu0 %241
        %243 = vset.pattern.permute.xlu0 1
        %244 = vperm.xlu0 %243, %v190
        %v245 = vpop.permute.xlu0 %244
        %246 = vset.pattern.permute.xlu0 1
        %247 = vperm.xlu0 %246, %v191
        %v248 = vpop.permute.xlu0 %247
        %249 = vset.pattern.permute.xlu0 1
        %250 = vperm.xlu0 %249, %v192
        %v251 = vpop.permute.xlu0 %250
        %vm252 = vcmp.eq.s32.totalorder %v194, %v242
        %vm253 = vcmp.eq.s32.totalorder %v195, %v242
        %vm254 = vcmp.eq.s32.totalorder %v194, %v245
        %vm255 = vcmp.eq.s32.totalorder %v195, %v245
        %vm256 = vcmp.eq.s32.totalorder %v194, %v248
        %vm257 = vcmp.eq.s32.totalorder %v195, %v248
        %vm258 = vcmp.eq.s32.totalorder %v194, %v251
        %vm259 = vcmp.eq.s32.totalorder %v195, %v251
        %v260 = vsel %vm252, 1, 0
        %v261 = vsel %vm253, 1, 0
        %v262 = vsel %vm254, 1, 0
        %v263 = vsel %vm255, 1, 0
        %v264 = vsel %vm256, 1, 0
        %v265 = vsel %vm257, 1, 0
        %v266 = vsel %vm258, 1, 0
        %v267 = vsel %vm259, 1, 0
        %v268 = vcvt.s32.f32 %v260
        %v269 = vcvt.s32.f32 %v261
        %v270 = vcvt.s32.f32 %v262
        %v271 = vcvt.s32.f32 %v263
        %v272 = vcvt.s32.f32 %v264
        %v273 = vcvt.s32.f32 %v265
        %v274 = vcvt.s32.f32 %v266
        %v275 = vcvt.s32.f32 %v267
        %v276 = vmax.f32 %v232, %v268
        %v277 = vmax.f32 %v233, %v269
        %v278 = vmax.f32 %v234, %v270
        %v279 = vmax.f32 %v235, %v271
        %v280 = vmax.f32 %v236, %v272
        %v281 = vmax.f32 %v237, %v273
        %v282 = vmax.f32 %v238, %v274
        %v283 = vmax.f32 %v239, %v275
        %284 = vset.pattern.permute.xlu0 2
        %285 = vperm.xlu0 %284, %v189
        %v286 = vpop.permute.xlu0 %285
        %287 = vset.pattern.permute.xlu0 2
        %288 = vperm.xlu0 %287, %v190
        %v289 = vpop.permute.xlu0 %288
        %290 = vset.pattern.permute.xlu0 2
        %291 = vperm.xlu0 %290, %v191
        %v292 = vpop.permute.xlu0 %291
        %293 = vset.pattern.permute.xlu0 2
        %294 = vperm.xlu0 %293, %v192
        %v295 = vpop.permute.xlu0 %294
        %vm296 = vcmp.eq.s32.totalorder %v194, %v286
        %vm297 = vcmp.eq.s32.totalorder %v195, %v286
        %vm298 = vcmp.eq.s32.totalorder %v194, %v289
        %vm299 = vcmp.eq.s32.totalorder %v195, %v289
        %vm300 = vcmp.eq.s32.totalorder %v194, %v292
        %vm301 = vcmp.eq.s32.totalorder %v195, %v292
        %vm302 = vcmp.eq.s32.totalorder %v194, %v295
        %vm303 = vcmp.eq.s32.totalorder %v195, %v295
        %v304 = vsel %vm296, 1, 0
        %v305 = vsel %vm297, 1, 0
        %v306 = vsel %vm298, 1, 0
        %v307 = vsel %vm299, 1, 0
        %v308 = vsel %vm300, 1, 0
        %v309 = vsel %vm301, 1, 0
        %v310 = vsel %vm302, 1, 0
        %v311 = vsel %vm303, 1, 0
        %v312 = vcvt.s32.f32 %v304
        %v313 = vcvt.s32.f32 %v305
        %v314 = vcvt.s32.f32 %v306
        %v315 = vcvt.s32.f32 %v307
        %v316 = vcvt.s32.f32 %v308
        %v317 = vcvt.s32.f32 %v309
        %v318 = vcvt.s32.f32 %v310
        %v319 = vcvt.s32.f32 %v311
        %v320 = vmax.f32 %v276, %v312
        %v321 = vmax.f32 %v277, %v313
        %v322 = vmax.f32 %v278, %v314
        %v323 = vmax.f32 %v279, %v315
        %v324 = vmax.f32 %v280, %v316
        %v325 = vmax.f32 %v281, %v317
        %v326 = vmax.f32 %v282, %v318
        %v327 = vmax.f32 %v283, %v319
        %328 = vset.pattern.permute.xlu0 3
        %329 = vperm.xlu0 %328, %v189
        %v330 = vpop.permute.xlu0 %329
        %331 = vset.pattern.permute.xlu0 3
        %332 = vperm.xlu0 %331, %v190
        %v333 = vpop.permute.xlu0 %332
        %334 = vset.pattern.permute.xlu0 3
        %335 = vperm.xlu0 %334, %v191
        %v336 = vpop.permute.xlu0 %335
        %337 = vset.pattern.permute.xlu0 3
        %338 = vperm.xlu0 %337, %v192
        %v339 = vpop.permute.xlu0 %338
        %vm340 = vcmp.eq.s32.totalorder %v194, %v330
        %vm341 = vcmp.eq.s32.totalorder %v195, %v330
        %vm342 = vcmp.eq.s32.totalorder %v194, %v333
        %vm343 = vcmp.eq.s32.totalorder %v195, %v333
        %vm344 = vcmp.eq.s32.totalorder %v194, %v336
        %vm345 = vcmp.eq.s32.totalorder %v195, %v336
        %vm346 = vcmp.eq.s32.totalorder %v194, %v339
        %vm347 = vcmp.eq.s32.totalorder %v195, %v339
        %v348 = vsel %vm340, 1, 0
        %v349 = vsel %vm341, 1, 0
        %v350 = vsel %vm342, 1, 0
        %v351 = vsel %vm343, 1, 0
        %v352 = vsel %vm344, 1, 0
        %v353 = vsel %vm345, 1, 0
        %v354 = vsel %vm346, 1, 0
        %v355 = vsel %vm347, 1, 0
        %v356 = vcvt.s32.f32 %v348
        %v357 = vcvt.s32.f32 %v349
        %v358 = vcvt.s32.f32 %v350
        %v359 = vcvt.s32.f32 %v351
        %v360 = vcvt.s32.f32 %v352
        %v361 = vcvt.s32.f32 %v353
        %v362 = vcvt.s32.f32 %v354
        %v363 = vcvt.s32.f32 %v355
        %v364 = vmax.f32 %v320, %v356
        %v365 = vmax.f32 %v321, %v357
        %v366 = vmax.f32 %v322, %v358
        %v367 = vmax.f32 %v323, %v359
        %v368 = vmax.f32 %v324, %v360
        %v369 = vmax.f32 %v325, %v361
        %v370 = vmax.f32 %v326, %v362
        %v371 = vmax.f32 %v327, %v363
        %372 = vset.pattern.permute.xlu0 4
        %373 = vperm.xlu0 %372, %v189
        %v374 = vpop.permute.xlu0 %373
        %375 = vset.pattern.permute.xlu0 4
        %376 = vperm.xlu0 %375, %v190
        %v377 = vpop.permute.xlu0 %376
        %378 = vset.pattern.permute.xlu0 4
        %379 = vperm.xlu0 %378, %v191
        %v380 = vpop.permute.xlu0 %379
        %381 = vset.pattern.permute.xlu0 4
        %382 = vperm.xlu0 %381, %v192
        %v383 = vpop.permute.xlu0 %382
        %vm384 = vcmp.eq.s32.totalorder %v194, %v374
        %vm385 = vcmp.eq.s32.totalorder %v195, %v374
        %vm386 = vcmp.eq.s32.totalorder %v194, %v377
        %vm387 = vcmp.eq.s32.totalorder %v195, %v377
        %vm388 = vcmp.eq.s32.totalorder %v194, %v380
        %vm389 = vcmp.eq.s32.totalorder %v195, %v380
        %vm390 = vcmp.eq.s32.totalorder %v194, %v383
        %vm391 = vcmp.eq.s32.totalorder %v195, %v383
        %v392 = vsel %vm384, 1, 0
        %v393 = vsel %vm385, 1, 0
        %v394 = vsel %vm386, 1, 0
        %v395 = vsel %vm387, 1, 0
        %v396 = vsel %vm388, 1, 0
        %v397 = vsel %vm389, 1, 0
        %v398 = vsel %vm390, 1, 0
        %v399 = vsel %vm391, 1, 0
        %v400 = vcvt.s32.f32 %v392
        %v401 = vcvt.s32.f32 %v393
        %v402 = vcvt.s32.f32 %v394
        %v403 = vcvt.s32.f32 %v395
        %v404 = vcvt.s32.f32 %v396
        %v405 = vcvt.s32.f32 %v397
        %v406 = vcvt.s32.f32 %v398
        %v407 = vcvt.s32.f32 %v399
        %v408 = vmax.f32 %v364, %v400
        %v409 = vmax.f32 %v365, %v401
        %v410 = vmax.f32 %v366, %v402
        %v411 = vmax.f32 %v367, %v403
        %v412 = vmax.f32 %v368, %v404
        %v413 = vmax.f32 %v369, %v405
        %v414 = vmax.f32 %v370, %v406
        %v415 = vmax.f32 %v371, %v407
        %416 = vset.pattern.permute.xlu0 5
        %417 = vperm.xlu0 %416, %v189
        %v418 = vpop.permute.xlu0 %417
        %419 = vset.pattern.permute.xlu0 5
        %420 = vperm.xlu0 %419, %v190
        %v421 = vpop.permute.xlu0 %420
        %422 = vset.pattern.permute.xlu0 5
        %423 = vperm.xlu0 %422, %v191
        %v424 = vpop.permute.xlu0 %423
        %425 = vset.pattern.permute.xlu0 5
        %426 = vperm.xlu0 %425, %v192
        %v427 = vpop.permute.xlu0 %426
        %vm428 = vcmp.eq.s32.totalorder %v194, %v418
        %vm429 = vcmp.eq.s32.totalorder %v195, %v418
        %vm430 = vcmp.eq.s32.totalorder %v194, %v421
        %vm431 = vcmp.eq.s32.totalorder %v195, %v421
        %vm432 = vcmp.eq.s32.totalorder %v194, %v424
        %vm433 = vcmp.eq.s32.totalorder %v195, %v424
        %vm434 = vcmp.eq.s32.totalorder %v194, %v427
        %vm435 = vcmp.eq.s32.totalorder %v195, %v427
        %v436 = vsel %vm428, 1, 0
        %v437 = vsel %vm429, 1, 0
        %v438 = vsel %vm430, 1, 0
        %v439 = vsel %vm431, 1, 0
        %v440 = vsel %vm432, 1, 0
        %v441 = vsel %vm433, 1, 0
        %v442 = vsel %vm434, 1, 0
        %v443 = vsel %vm435, 1, 0
        %v444 = vcvt.s32.f32 %v436
        %v445 = vcvt.s32.f32 %v437
        %v446 = vcvt.s32.f32 %v438
        %v447 = vcvt.s32.f32 %v439
        %v448 = vcvt.s32.f32 %v440
        %v449 = vcvt.s32.f32 %v441
        %v450 = vcvt.s32.f32 %v442
        %v451 = vcvt.s32.f32 %v443
        %v452 = vmax.f32 %v408, %v444
        %v453 = vmax.f32 %v409, %v445
        %v454 = vmax.f32 %v410, %v446
        %v455 = vmax.f32 %v411, %v447
        %v456 = vmax.f32 %v412, %v448
        %v457 = vmax.f32 %v413, %v449
        %v458 = vmax.f32 %v414, %v450
        %v459 = vmax.f32 %v415, %v451
        %460 = vset.pattern.permute.xlu0 6
        %461 = vperm.xlu0 %460, %v189
        %v462 = vpop.permute.xlu0 %461
        %463 = vset.pattern.permute.xlu0 6
        %464 = vperm.xlu0 %463, %v190
        %v465 = vpop.permute.xlu0 %464
        %466 = vset.pattern.permute.xlu0 6
        %467 = vperm.xlu0 %466, %v191
        %v468 = vpop.permute.xlu0 %467
        %469 = vset.pattern.permute.xlu0 6
        %470 = vperm.xlu0 %469, %v192
        %v471 = vpop.permute.xlu0 %470
        %vm472 = vcmp.eq.s32.totalorder %v194, %v462
        %vm473 = vcmp.eq.s32.totalorder %v195, %v462
        %vm474 = vcmp.eq.s32.totalorder %v194, %v465
        %vm475 = vcmp.eq.s32.totalorder %v195, %v465
        %vm476 = vcmp.eq.s32.totalorder %v194, %v468
        %vm477 = vcmp.eq.s32.totalorder %v195, %v468
        %vm478 = vcmp.eq.s32.totalorder %v194, %v471
        %vm479 = vcmp.eq.s32.totalorder %v195, %v471
        %v480 = vsel %vm472, 1, 0
        %v481 = vsel %vm473, 1, 0
        %v482 = vsel %vm474, 1, 0
        %v483 = vsel %vm475, 1, 0
        %v484 = vsel %vm476, 1, 0
        %v485 = vsel %vm477, 1, 0
        %v486 = vsel %vm478, 1, 0
        %v487 = vsel %vm479, 1, 0
        %v488 = vcvt.s32.f32 %v480
        %v489 = vcvt.s32.f32 %v481
        %v490 = vcvt.s32.f32 %v482
        %v491 = vcvt.s32.f32 %v483
        %v492 = vcvt.s32.f32 %v484
        %v493 = vcvt.s32.f32 %v485
        %v494 = vcvt.s32.f32 %v486
        %v495 = vcvt.s32.f32 %v487
        %v496 = vmax.f32 %v452, %v488
        %v497 = vmax.f32 %v453, %v489
        %v498 = vmax.f32 %v454, %v490
        %v499 = vmax.f32 %v455, %v491
        %v500 = vmax.f32 %v456, %v492
        %v501 = vmax.f32 %v457, %v493
        %v502 = vmax.f32 %v458, %v494
        %v503 = vmax.f32 %v459, %v495
        %504 = vset.pattern.permute.xlu0 7
        %505 = vperm.xlu0 %504, %v189
        %v506 = vpop.permute.xlu0 %505
        %507 = vset.pattern.permute.xlu0 7
        %508 = vperm.xlu0 %507, %v190
        %v509 = vpop.permute.xlu0 %508
        %510 = vset.pattern.permute.xlu0 7
        %511 = vperm.xlu0 %510, %v191
        %v512 = vpop.permute.xlu0 %511
        %513 = vset.pattern.permute.xlu0 7
        %514 = vperm.xlu0 %513, %v192
        %v515 = vpop.permute.xlu0 %514
        %vm516 = vcmp.eq.s32.totalorder %v194, %v506
        %vm517 = vcmp.eq.s32.totalorder %v195, %v506
        %vm518 = vcmp.eq.s32.totalorder %v194, %v509
        %vm519 = vcmp.eq.s32.totalorder %v195, %v509
        %vm520 = vcmp.eq.s32.totalorder %v194, %v512
        %vm521 = vcmp.eq.s32.totalorder %v195, %v512
        %vm522 = vcmp.eq.s32.totalorder %v194, %v515
        %vm523 = vcmp.eq.s32.totalorder %v195, %v515
        %v524 = vsel %vm516, 1, 0
        %v525 = vsel %vm517, 1, 0
        %v526 = vsel %vm518, 1, 0
        %v527 = vsel %vm519, 1, 0
        %v528 = vsel %vm520, 1, 0
        %v529 = vsel %vm521, 1, 0
        %v530 = vsel %vm522, 1, 0
        %v531 = vsel %vm523, 1, 0
        %v532 = vcvt.s32.f32 %v524
        %v533 = vcvt.s32.f32 %v525
        %v534 = vcvt.s32.f32 %v526
        %v535 = vcvt.s32.f32 %v527
        %v536 = vcvt.s32.f32 %v528
        %v537 = vcvt.s32.f32 %v529
        %v538 = vcvt.s32.f32 %v530
        %v539 = vcvt.s32.f32 %v531
        %v540 = vmax.f32 %v496, %v532
        %v541 = vmax.f32 %v497, %v533
        %v542 = vmax.f32 %v498, %v534
        %v543 = vmax.f32 %v499, %v535
        %v544 = vmax.f32 %v500, %v536
        %v545 = vmax.f32 %v501, %v537
        %v546 = vmax.f32 %v502, %v538
        %v547 = vmax.f32 %v503, %v539
        %v548 = vld [vmem:[#allocation2] sm:$0xff]
        %v549 = vld [vmem:[#allocation2 + $0x8] sm:$0xff]
        %v550 = vld [vmem:[#allocation2 + $0x10] sm:$0xff]
        %v551 = vld [vmem:[#allocation2 + $0x18] sm:$0xff]
        %v552 = vld [vmem:[#allocation2 + $0x20] sm:$0xff]
        %v553 = vld [vmem:[#allocation2 + $0x28] sm:$0xff]
        %v554 = vld [vmem:[#allocation2 + $0x30] sm:$0xff]
        %v555 = vld [vmem:[#allocation2 + $0x38] sm:$0xff]
        %v556 = vld [vmem:[#allocation2 + $0x40] sm:$0xff]
        %v557 = vld [vmem:[#allocation2 + $0x48] sm:$0xff]
        %v558 = vld [vmem:[#allocation2 + $0x50] sm:$0xff]
        %v559 = vld [vmem:[#allocation2 + $0x58] sm:$0xff]
        %v560 = vld [vmem:[#allocation2 + $0x60] sm:$0xff]
        %v561 = vld [vmem:[#allocation2 + $0x68] sm:$0xff]
        %v562 = vld [vmem:[#allocation2 + $0x70] sm:$0xff]
        %v563 = vld [vmem:[#allocation2 + $0x78] sm:$0xff]
        %v564 = vld [vmem:[#allocation2 + $0x80] sm:$0xff]
        %v565 = vld [vmem:[#allocation2 + $0x88] sm:$0xff]
        %v566 = vld [vmem:[#allocation2 + $0x90] sm:$0xff]
        %v567 = vld [vmem:[#allocation2 + $0x98] sm:$0xff]
        %v568 = vld [vmem:[#allocation2 + $0xa0] sm:$0xff]
        %v569 = vld [vmem:[#allocation2 + $0xa8] sm:$0xff]
        %v570 = vld [vmem:[#allocation2 + $0xb0] sm:$0xff]
        %v571 = vld [vmem:[#allocation2 + $0xb8] sm:$0xff]
        %v572 = vld [vmem:[#allocation2 + $0xc0] sm:$0xff]
        %v573 = vld [vmem:[#allocation2 + $0xc8] sm:$0xff]
        %v574 = vld [vmem:[#allocation2 + $0xd0] sm:$0xff]
        %v575 = vld [vmem:[#allocation2 + $0xd8] sm:$0xff]
        %v576 = vld [vmem:[#allocation2 + $0xe0] sm:$0xff]
        %v577 = vld [vmem:[#allocation2 + $0xe8] sm:$0xff]
        %v578 = vld [vmem:[#allocation2 + $0xf0] sm:$0xff]
        %v579 = vld [vmem:[#allocation2 + $0xf8] sm:$0xff]
        %v580 = vld [vmem:[%s2] sm:$0x1]
        %v582 = vperm.slane %v580, 0
        %584 = vmatpush.msra.mxu0 %v563
        %585 = vmatpush.msra.mxu0 %v562
        %586 = vmatpush.msra.mxu0 %v561
        %587 = vmatpush.msra.mxu0 %v560
        %588 = vmatpush.msra.mxu0 %v559
        %589 = vmatpush.msra.mxu0 %v558
        %590 = vmatpush.msra.mxu0 %v557
        %591 = vmatpush.msra.mxu0 %v556
        %592 = vmatpush.msra.mxu0 %v555
        %593 = vmatpush.msra.mxu0 %v554
        %594 = vmatpush.msra.mxu0 %v553
        %595 = vmatpush.msra.mxu0 %v552
        %596 = vmatpush.msra.mxu0 %v551
        %597 = vmatpush.msra.mxu0 %v550
        %598 = vmatpush.msra.mxu0 %v549
        %599 = vmatpush.msra.mxu0 %v548
        %600 = vmatmul.f32.gmra.mxu0 %v540
        %v601 = vpop.f32.mrf.mxu0
        %v602 = vadd.f32 %v582, %v601
        %603 = vmatmul.f32.gmra.mxu0 %v542
        %v604 = vpop.f32.mrf.mxu0
        %v605 = vadd.f32 %v582, %v604
        %606 = vmatmul.f32.gmra.mxu0 %v544
        %v607 = vpop.f32.mrf.mxu0
        %v608 = vadd.f32 %v582, %v607
        %609 = vmatmul.f32.gmra.mxu0 %v546
        %v610 = vpop.f32.mrf.mxu0
        %v611 = vadd.f32 %v582, %v610
        %612 = vdwg.mxu0
        %613 = vmatpush.msra.mxu0 %v579
        %614 = vmatpush.msra.mxu0 %v578
        %615 = vmatpush.msra.mxu0 %v577
        %616 = vmatpush.msra.mxu0 %v576
        %617 = vmatpush.msra.mxu0 %v575
        %618 = vmatpush.msra.mxu0 %v574
        %619 = vmatpush.msra.mxu0 %v573
        %620 = vmatpush.msra.mxu0 %v572
        %621 = vmatpush.msra.mxu0 %v571
        %622 = vmatpush.msra.mxu0 %v570
        %623 = vmatpush.msra.mxu0 %v569
        %624 = vmatpush.msra.mxu0 %v568
        %625 = vmatpush.msra.mxu0 %v567
        %626 = vmatpush.msra.mxu0 %v566
        %627 = vmatpush.msra.mxu0 %v565
        %628 = vmatpush.msra.mxu0 %v564
        %629 = vmatmul.f32.gmra.mxu0 %v541
        %v630 = vpop.f32.mrf.mxu0
        %v631 = vadd.f32 %v602, %v630
        %632 = vmatmul.f32.gmra.mxu0 %v543
        %v633 = vpop.f32.mrf.mxu0
        %v634 = vadd.f32 %v605, %v633
        %635 = vmatmul.f32.gmra.mxu0 %v545
        %v636 = vpop.f32.mrf.mxu0
        %v637 = vadd.f32 %v608, %v636
        %638 = vmatmul.f32.gmra.mxu0 %v547
        %v639 = vpop.f32.mrf.mxu0
        %v640 = vadd.f32 %v611, %v639
        %641 = vdwg.mxu0
        %642 = vst [vmem:[%s181] sm:$0xff] %v631
        %643 = vst [vmem:[%s181 + $0x8] sm:$0xff] %v634
        %644 = vst [vmem:[%s181 + $0x10] sm:$0xff] %v637
        %645 = vst [vmem:[%s181 + $0x18] sm:$0xff] %v640
        %s646 = sand.u32 %s94, 1
        %s647 = scalar_lea.sflag [#allocation4], %s646
        %s648 = sand.u32 %s94, 1
        %s649 = smul.addr %s648, 32
        %s650 = scalar_lea.vmem [#allocation5], %s649
        // Predicated region
        $region37: #{tpu_custom_call.1} parent=31 // pred_check
          %p651 = pneg %p104
        $region38: #{tpu_custom_call.1} parent=31 // pred_check_branch
          %653 = sbr.rel (%p651) target = $region40
        $region39: #{tpu_custom_call.1} parent=31 // pred_region
          %s654 = smul.u32 4, %s18
          %656 = vsyncadd %s647, 0
          %s657 = smul.addr %s654, 8
          %s658 = scalar_lea.hbm %s3, %s657
          %s659 = sshll.u32 %s650, 4
          %s660 = int_to_ptr.vmem [resolvable:$true] %s659
          %s661 = sshll.u32 %s658, 4
          %s662 = int_to_ptr.hbm [resolvable:$true] %s661
          %667 = dma.vmem_to_hbm [thread:$0]  %s660, 512, %s662, %s647, 128, 128, 8
        $region40: #{tpu_custom_call.1} parent=31 // pred_fallthru
          _
      $region32: #{tpu_custom_call.1} parent=5 // pred_fallthru
        _
      %p668 = scmp.le.s32.totalorder 2, %s13
      // Predicated region
      $region41: #{tpu_custom_call.1} parent=5 // pred_check
        %p669 = pneg %p668
      $region42: #{tpu_custom_call.1} parent=5 // pred_check_branch
        %671 = sbr.rel (%p669) target = $region44
      $region43: #{tpu_custom_call.1} parent=5 // pred_region
        %s672 = ssub.s32 %s13, 2
        // Predicated region
        $region45: #{tpu_custom_call.1} parent=43 // pred_check
          %p673 = pneg %p110
        $region46: #{tpu_custom_call.1} parent=43 // pred_check_branch
          %675 = sbr.rel (%p673) target = $region48
        $region47: #{tpu_custom_call.1} parent=43 // pred_region
          %s676 = sand.u32 %s95, 1
          %s677 = scalar_lea.sflag [#allocation4], %s676
          %s678 = sand.u32 %s95, 1
          %s679 = smul.addr %s678, 32
          %s680 = scalar_lea.vmem [#allocation5], %s679
          %682 = dma.done %s677, 512
        $region48: #{tpu_custom_call.1} parent=43 // pred_fallthru
          _
      $region44: #{tpu_custom_call.1} parent=5 // pred_fallthru
        _
    $region6: #{tpu_custom_call.1} parent=1 // loop_footer
      %s17 = sadd.s32 1, %s13
    $region7: #{tpu_custom_call.1} parent=1 // loop_footer_branch
      %12 = sbr.rel target = $region3
    $region8: #{tpu_custom_call.1} parent=1 // loop_exit
      _
    %683 = vsyncpa [#allocation3], 1
    %s684 = scalar_lea.sflag [#allocation3], 1
    %685 = vsyncpa %s684, 1
    %686 = vsyncpa [#allocation4], 1
    %s687 = scalar_lea.sflag [#allocation4], 1
    %688 = vsyncpa %s687, 1

</llo_original>
